<compile_context>
chip_gen: v7x
topology: tpu7x:2x2x1
jax: 0.10.0
libtpu: 0.0.40
codegen_flags: <defaults>
</compile_context>

<pallas_src>
import functools
import numpy as np
import jax
import jax.numpy as jnp
from jax.experimental import pallas as pl
from jax.experimental.pallas import tpu as pltpu

BN_EPS = 1e-5
ENC_CH = [16, 32, 64, 128, 256, 512, 1024]
DEC_CH = [1024, 512, 256, 128, 64, 32, 16]
CLS_PAD = 128        # classifier logit padded to a full 128-lane tile
RMOD = 1024          # coordinate hashing modulus (coords stay well inside +-512)
MAX_KEEP = 4096      # runtime guard on decoder growth (see TODO(synk) below)


def _round_up(x, m):
    return ((x + m - 1) // m) * m


def _elu(y):  # ELU(alpha=1), f32
    return jnp.where(y > 0, y, jnp.exp(jnp.minimum(y, 0.0)) - 1.0)


# ------------------------------ Pallas kernels ------------------------------

def _fold_kernel(x_ref, w_ref, s_ref, b_ref, *rest, apply_elu, has_cls):
    """K folded into the contraction: out = epi(x @ w); optional fused classifier."""
    if has_cls:
        wc_ref, bc_ref, o_ref, c_ref = rest
    else:
        (o_ref,) = rest
    y = jnp.dot(x_ref[...], w_ref[...], preferred_element_type=jnp.float32)
    y = y * s_ref[...] + b_ref[...]
    if apply_elu:
        y = _elu(y)
    o_ref[...] = y.astype(o_ref.dtype)
    if has_cls:
        c_ref[...] = (jnp.dot(y, wc_ref[...], preferred_element_type=jnp.float32)
                      + bc_ref[...]).astype(c_ref.dtype)


def _kconv_kernel(g_ref, w_ref, s_ref, b_ref, *rest, apply_elu, has_cls):
    """K-reduction matmul (big-channel layers): acc += G[k] @ W[k], fused epilogue."""
    if has_cls:
        wc_ref, bc_ref, o_ref, c_ref, acc_ref = rest
    else:
        o_ref, acc_ref = rest
    k = pl.program_id(1)

    @pl.when(k == 0)
    def _():
        acc_ref[...] = jnp.zeros_like(acc_ref)

    acc_ref[...] += jnp.dot(g_ref[0], w_ref[0], preferred_element_type=jnp.float32)

    @pl.when(k == pl.num_programs(1) - 1)
    def _():
        y = acc_ref[...] * s_ref[...] + b_ref[...]
        if apply_elu:
            y = _elu(y)
        o_ref[...] = y.astype(o_ref.dtype)
        if has_cls:
            c_ref[...] = (jnp.dot(y, wc_ref[...], preferred_element_type=jnp.float32)
                          + bc_ref[...]).astype(c_ref.dtype)


def _pallas_fold(x, w, scale, bias, wc, bc, apply_elu, tile, out_dtype):
    n_pad, kc = x.shape
    c_out = w.shape[-1]
    has_cls = wc is not None
    in_specs = [
        pl.BlockSpec((tile, kc), lambda n: (n, 0)),
        pl.BlockSpec((kc, c_out), lambda n: (0, 0)),     # constant -> resident
        pl.BlockSpec((1, c_out), lambda n: (0, 0)),
        pl.BlockSpec((1, c_out), lambda n: (0, 0)),
    ]
    args = [x, w, scale, bias]
    out_shape = jax.ShapeDtypeStruct((n_pad, c_out), out_dtype)
    out_spec = pl.BlockSpec((tile, c_out), lambda n: (n, 0))
    if has_cls:
        cc = wc.shape[-1]
        in_specs += [pl.BlockSpec((c_out, cc), lambda n: (0, 0)),
                     pl.BlockSpec((1, cc), lambda n: (0, 0))]
        args += [wc, bc]
        out_shape = (out_shape, jax.ShapeDtypeStruct((n_pad, cc), jnp.float32))
        out_spec = (out_spec, pl.BlockSpec((tile, cc), lambda n: (n, 0)))
    kern = functools.partial(_fold_kernel, apply_elu=apply_elu, has_cls=has_cls)
    return pl.pallas_call(
        kern,
        out_shape=out_shape,
        grid_spec=pltpu.PrefetchScalarGridSpec(
            num_scalar_prefetch=0,
            grid=(n_pad // tile,),
            in_specs=in_specs,
            out_specs=out_spec),
        compiler_params=pltpu.CompilerParams(dimension_semantics=("parallel",)),
    )(*args)


def _pallas_kconv(g, w, scale, bias, wc, bc, apply_elu, tile, out_dtype):
    K, n_pad, c_in = g.shape
    c_out = w.shape[-1]
    has_cls = wc is not None
    in_specs = [
        pl.BlockSpec((1, tile, c_in), lambda n, k: (k, n, 0)),
        pl.BlockSpec((1, c_in, c_out), lambda n, k: (k, 0, 0)),
        pl.BlockSpec((1, c_out), lambda n, k: (0, 0)),
        pl.BlockSpec((1, c_out), lambda n, k: (0, 0)),
    ]
    args = [g, w, scale, bias]
    out_shape = jax.ShapeDtypeStruct((n_pad, c_out), out_dtype)
    out_spec = pl.BlockSpec((tile, c_out), lambda n, k: (n, 0))
    if has_cls:
        cc = wc.shape[-1]
        in_specs += [pl.BlockSpec((c_out, cc), lambda n, k: (0, 0)),
                     pl.BlockSpec((1, cc), lambda n, k: (0, 0))]
        args += [wc, bc]
        out_shape = (out_shape, jax.ShapeDtypeStruct((n_pad, cc), jnp.float32))
        out_spec = (out_spec, pl.BlockSpec((tile, cc), lambda n, k: (n, 0)))
    kern = functools.partial(_kconv_kernel, apply_elu=apply_elu, has_cls=has_cls)
    return pl.pallas_call(
        kern,
        out_shape=out_shape,
        grid_spec=pltpu.PrefetchScalarGridSpec(
            num_scalar_prefetch=0,
            grid=(n_pad // tile, K),
            in_specs=in_specs,
            out_specs=out_spec,
            scratch_shapes=[pltpu.VMEM((tile, c_out), jnp.float32)]),
        compiler_params=pltpu.CompilerParams(
            dimension_semantics=("parallel", "arbitrary")),
    )(*args)


@functools.partial(jax.jit, static_argnames=("apply_elu", "tile", "fold"))
def _conv_device(feats_ext, idx, w, scale, bias, wc, bc, apply_elu, tile, fold):
    c_in = feats_ext.shape[1]
    if fold:
        n_pad, K = idx.shape
        x = jnp.take(feats_ext, idx, axis=0).reshape(n_pad, K * c_in)
        w2 = w.reshape(K * c_in, w.shape[-1])
        return _pallas_fold(x, w2, scale, bias, wc, bc, apply_elu, tile, jnp.bfloat16)
    g = jnp.take(feats_ext, idx, axis=0)   # [K, n_pad, c_in]
    return _pallas_kconv(g, w, scale, bias, wc, bc, apply_elu, tile, jnp.bfloat16)


@functools.partial(jax.jit, static_argnames=("apply_elu", "tile"))
def _dense_device(x, w, scale, bias, apply_elu, tile):
    return _pallas_fold(x, w, scale, bias, None, None, apply_elu, tile, jnp.float32)


# --------------------- host-side sparse coordinate glue --------------------

def _keys(coords):
    c = coords.astype(np.int64)
    return (((c[:, 0] * RMOD + (c[:, 1] + RMOD // 2)) * RMOD
             + (c[:, 2] + RMOD // 2)) * RMOD + (c[:, 3] + RMOD // 2))


def offsets3(step):   # 3x3x3 kernel offsets (in units of the input tensor stride)
    r = (-step, 0, step)
    return np.array([(i, j, k) for i in r for j in r for k in r], np.int64)


def offsets_up2(step):  # 2x2x2 generative-transpose child offsets
    r = (0, step)
    return np.array([(i, j, k) for i in r for j in r for k in r], np.int64)


def stride_coords(coords, s):
    c = coords.copy()
    c[:, 1:4] = (c[:, 1:4] // s) * s
    return np.unique(c, axis=0)


def deconv_out_coords(coords, child_step):
    outs = []
    for off in offsets_up2(child_step):
        c = coords.copy()
        c[:, 1:4] += off
        outs.append(c)
    return np.concatenate(outs, axis=0)


def build_kernel_map(out_coords, in_coords, offsets):
    """idx[K, N_out] into rows of in_coords; missing neighbor -> N_in (zero row)."""
    n_in = in_coords.shape[0]
    in_k = _keys(in_coords)
    order = np.argsort(in_k)
    in_sorted = in_k[order]
    K = offsets.shape[0]
    n_out = out_coords.shape[0]
    q = np.repeat(out_coords[None, :, :], K, axis=0).astype(np.int64)
    q[:, :, 1:4] += offsets[:, None, :]
    qk = _keys(q.reshape(-1, 4))
    pos = np.clip(np.searchsorted(in_sorted, qk), 0, n_in - 1)
    found = in_sorted[pos] == qk
    idx = np.where(found, order[pos], n_in).astype(np.int32)
    return idx.reshape(K, n_out)


def get_target(out_coords, gt_coords, ts):
    # ME: stride target_key to tensor_stride, kernel_size=1 exact match
    strided = stride_coords(gt_coords, ts)
    sk = np.sort(_keys(strided))
    ok = _keys(out_coords)
    pos = np.clip(np.searchsorted(sk, ok), 0, len(sk) - 1)
    return sk[pos] == ok


# ------------------------------ layer wrappers ------------------------------

def bn_sb(c):
    # eval-mode BatchNorm with fresh running stats: y = x / sqrt(1 + eps)
    return (jnp.full((1, c), 1.0 / np.sqrt(1.0 + BN_EPS), jnp.float32),
            jnp.zeros((1, c), jnp.float32))


def sparse_conv(feats, in_coords, out_coords, offsets, w, scale, bias,
                wc=None, bc=None, apply_elu=True):
    """Sparse (transposed) conv; optional fused 1x1 classifier on the output."""
    n_out = out_coords.shape[0]
    n_in, c_in = feats.shape
    c_out = w.shape[-1]
    idx = build_kernel_map(out_coords, in_coords, np.asarray(offsets))
    # Drop kernel offsets with no hits anywhere (pure-zero DMA + matmul work).
    hit = ~np.all(idx == n_in, axis=1)
    if not hit.any():
        hit[0] = True
    if not hit.all():
        idx = idx[hit]
        w = jnp.take(w, jnp.asarray(np.nonzero(hit)[0].astype(np.int32)), axis=0)
    K = idx.shape[0]
    kc = K * c_in
    # Fold K into the contraction whenever the weight slab fits comfortably in VMEM.
    fold = (kc <= 8192) and (kc * c_out * 2 <= 4 * 1024 * 1024)
    if fold:
        tile = 1024 if kc <= 1024 else 512 if kc <= 2048 else 256 if kc <= 4096 else 128
    else:
        tile = 256
    n_pad = _round_up(max(n_out, 1), 8)
    if n_pad >= tile:
        n_pad = _round_up(n_pad, tile)
    else:
        tile = n_pad
    idx_p = np.full((K, n_pad), n_in, np.int32)
    idx_p[:, :n_out] = idx
    feats_ext = jnp.concatenate(
        [feats.astype(jnp.bfloat16), jnp.zeros((1, c_in), jnp.bfloat16)], axis=0)
    idx_dev = jnp.asarray(idx_p.T if fold else idx_p)
    res = _conv_device(feats_ext, idx_dev, w, scale, bias, wc, bc,
                       apply_elu=apply_elu, tile=tile, fold=fold)
    if wc is None:
        return res[:n_out]
    f, cls = res
    return f[:n_out], cls[:n_out]


def pallas_dense(x, w, bias=None, apply_elu=False):
    n, c_in = x.shape
    c_out = w.shape[-1]
    n_pad = _round_up(max(n, 1), 8)
    tile = min(n_pad, 256)
    if n_pad > 256:
        n_pad = _round_up(n_pad, 256)
    xp = jnp.zeros((n_pad, c_in), jnp.bfloat16).at[:n].set(x.astype(jnp.bfloat16))
    scale = jnp.ones((1, c_out), jnp.float32)
    b = bias if bias is not None else jnp.zeros((1, c_out), jnp.float32)
    return _dense_device(xp, w.astype(jnp.bfloat16), scale, b,
                         apply_elu=apply_elu, tile=tile)[:n]


def global_avg_pool(feats, coords, B):
    n = coords.shape[0]
    n_cols = _round_up(n, 8)
    P = np.zeros((B, n_cols), np.float32)
    for b in range(B):
        rows = np.nonzero(coords[:, 0] == b)[0]
        if len(rows):
            P[b, rows] = 1.0 / len(rows)
    fpad = jnp.zeros((n_cols, feats.shape[1]), jnp.bfloat16).at[:n].set(
        feats.astype(jnp.bfloat16))
    return pallas_dense(jnp.asarray(P), fpad)


# -------------------------------- parameters --------------------------------

class KeyGen:
    def __init__(self, seed):
        self._key = jax.random.PRNGKey(seed)

    def __call__(self):
        self._key, sub = jax.random.split(self._key)
        return sub


def conv_w(key, k_vol, c_in, c_out):
    std = float(np.sqrt(2.0 / (k_vol * c_in)))
    return (std * jax.random.normal(key, (k_vol, c_in, c_out), jnp.float32)
            ).astype(jnp.bfloat16)


def deconv_w(key, k_vol, c_in, c_out):
    std = float(np.sqrt(2.0 / c_in))  # one offset contributes per output site
    return (std * jax.random.normal(key, (k_vol, c_in, c_out), jnp.float32)
            ).astype(jnp.bfloat16)


def make_params(seed=1):
    kg = KeyGen(seed)
    P = {}
    c_in = 8  # 1 occupancy channel zero-padded to 8 lanes
    for b, ch in enumerate(ENC_CH):
        P[f"e{b}_w1"] = conv_w(kg(), 27, c_in, ch)   # stride-2 conv, kernel 3
        P[f"e{b}_w2"] = conv_w(kg(), 27, ch, ch)     # stride-1 conv, kernel 3
        c_in = ch
    for name in ("mean", "lv"):
        P[f"lin_{name}_w"] = ((1.0 / np.sqrt(1024.0)) * jax.random.normal(
            kg(), (1024, 1024), jnp.float32)).astype(jnp.bfloat16)
        P[f"lin_{name}_b"] = jnp.zeros((1, 1024), jnp.float32)
    # decoder block1 has two (deconv, conv) pairs
    P["d1_up_a"], P["d1_conv_a"] = deconv_w(kg(), 8, 1024, 1024), conv_w(kg(), 27, 1024, 1024)
    P["d1_up_b"], P["d1_conv_b"] = deconv_w(kg(), 8, 1024, 512), conv_w(kg(), 27, 512, 512)
    for lvl in range(2, 7):
        ci, co = DEC_CH[lvl - 1], DEC_CH[lvl]
        P[f"d{lvl}_up"] = deconv_w(kg(), 8, ci, co)
        P[f"d{lvl}_conv"] = conv_w(kg(), 27, co, co)
    for lvl in range(1, 7):
        c = DEC_CH[lvl]
        w = (1.0 / np.sqrt(c)) * jax.random.normal(kg(), (c, CLS_PAD), jnp.float32)
        P[f"d{lvl}_cls_w"] = w.at[:, 1:].set(0.0)  # true out-dim 1, padded to 128 lanes
        P[f"d{lvl}_cls_b"] = jnp.zeros((1, CLS_PAD), jnp.float32)
    return P


# --------------------------------- forward ----------------------------------

def run_encoder(P, coords0, feats0, B):
    coords, feats, ts = coords0, feats0, 1
    for b, ch in enumerate(ENC_CH):
        sc, bi = bn_sb(ch)
        new_ts = ts * 2
        out_coords = stride_coords(coords, new_ts)
        feats = sparse_conv(feats, coords, out_coords, offsets3(ts), P[f"e{b}_w1"], sc, bi)
        coords, ts = out_coords, new_ts
        feats = sparse_conv(feats, coords, coords, offsets3(ts), P[f"e{b}_w2"], sc, bi)
    pooled = global_avg_pool(feats, coords, B)
    # fuse the two 1024->1024 linears into a single 1024->2048 matmul
    wml = jnp.concatenate([P["lin_mean_w"], P["lin_lv_w"]], axis=1)
    bml = jnp.concatenate([P["lin_mean_b"], P["lin_lv_b"]], axis=1)
    ml = pallas_dense(pooled, wml, bml)
    mean, log_var = ml[:, :1024], ml[:, 1024:]
    return mean, log_var


def up_block(feats, coords, ts, w_up, w_conv, wc=None, bc=None):
    ch = w_up.shape[-1]
    child = ts // 2
    sc, bi = bn_sb(ch)
    out_coords = deconv_out_coords(coords, child)
    feats = sparse_conv(feats, coords, out_coords, -offsets_up2(child), w_up, sc, bi)
    coords, ts = out_coords, child
    res = sparse_conv(feats, coords, coords, offsets3(ts), w_conv, sc, bi, wc=wc, bc=bc)
    if wc is None:
        return res, coords, ts
    f, cls = res
    return f, coords, ts, cls


def run_decoder(P, z_feats, z_coords, gt_coords):
    out_cls, targets = [], []
    feats, coords, ts = z_feats, z_coords, 128  # Decoder.resolution = 128
    feats, coords, ts = up_block(feats, coords, ts, P["d1_up_a"], P["d1_conv_a"])
    for lvl in range(1, 7):
        if lvl == 1:
            feats, coords, ts, cls = up_block(
                feats, coords, ts, P["d1_up_b"], P["d1_conv_b"],
                wc=P["d1_cls_w"], bc=P["d1_cls_b"])
        else:
            feats, coords, ts, cls = up_block(
                feats, coords, ts, P[f"d{lvl}_up"], P[f"d{lvl}_conv"],
                wc=P[f"d{lvl}_cls_w"], bc=P[f"d{lvl}_cls_b"])
        out_cls.append(cls[:, :1])
        targets.append(jnp.asarray(get_target(coords, gt_coords, ts)))
        # TODO(synk): host round-trip per level -- the keep mask must reach the
        # host because coordinate bookkeeping (kernel maps) is host-side numpy.
        scores = np.asarray(cls[:, 0])
        keep = scores > 0  # eval: keep = F > 0
        if lvl < 6 and not keep.any():
            # TODO(synk): ME would carry an empty sparse tensor here (and fail
            # downstream); keep the top-scoring site so the run stays alive.
            keep[int(np.argmax(scores))] = True
        if int(keep.sum()) > MAX_KEEP:
            # TODO(synk): runtime guard only -- ME keeps every cls>0 site; with
            # random weights that can grow 8x per level, so cap to the MAX_KEEP
            # best-scoring sites to bound the synthetic run.
            order = np.argsort(-scores)
            capped = np.zeros_like(keep)
            capped[order[:MAX_KEEP]] = True
            keep &= capped
        if lvl < 6 or keep.any():
            sel = jnp.asarray(np.nonzero(keep)[0].astype(np.int32))
            feats = jnp.take(feats, sel, axis=0)
            coords = coords[keep]
    return out_cls, targets, (feats, coords)


def vae_forward(P, coords0, feats0, gt_coords, B):
    means, log_vars = run_encoder(P, coords0, feats0, B)
    zs = means  # eval mode: no reparameterization noise
    z_coords = np.stack([np.array([b, 0, 0, 0], np.int64) for b in range(B)], axis=0)
    out_cls, targets, sout = run_decoder(P, zs, z_coords, gt_coords)
    return out_cls, targets, sout, means, log_vars, zs


# ----------------------------------- main ------------------------------------

if __name__ == "__main__":
    B, GRID, NPTS = 2, 16, 64  # small sparse occupancy input
    key = jax.random.PRNGKey(0)
    coords_list = []
    for b in range(B):
        perm = np.asarray(jax.random.permutation(jax.random.fold_in(key, b), GRID ** 3))[:NPTS]
        x, y, z = perm // (GRID * GRID), (perm // GRID) % GRID, perm % GRID
        coords_list.append(np.stack([np.full(NPTS, b), x, y, z], axis=1))
    coords0 = np.concatenate(coords_list, axis=0).astype(np.int64)
    feats0 = jnp.zeros((coords0.shape[0], 8), jnp.float32).at[:, 0].set(1.0)  # 1 ch, padded to 8
    gt_coords = coords0.copy()  # target_key: ground-truth occupied voxels

    params = make_params(seed=1)
    out_cls, targets, (out6_f, out6_c), means, log_vars, zs = vae_forward(
        params, coords0, feats0, gt_coords, B)

    jax.block_until_ready([means, log_vars, zs, out6_f] + list(out_cls) + list(targets))
    print("KERNEL_OK")
</pallas_src>

<mosaic_0001>
module attributes {stable_mosaic.version = 11 : i64} {
  func.func @_fold_kernel(%arg0: i32, %arg1: memref<128x192xbf16, #tpu.memory_space<vmem>>, %arg2: memref<192x16xbf16, #tpu.memory_space<vmem>>, %arg3: memref<1x16xf32, #tpu.memory_space<vmem>>, %arg4: memref<1x16xf32, #tpu.memory_space<vmem>>, %arg5: memref<128x16xbf16, #tpu.memory_space<vmem>>) attributes {dimension_semantics = [#tpu.dimension_semantics<parallel>], iteration_bounds = array<i64: 1>, scalar_prefetch = 0 : i64, scratch_operands = 0 : i64, tpu.core_type = #tpu.core_type<tc>, window_params = [{transform_indices = @transform_0, window_bounds = array<i64: 128, 192>}, {pipeline_mode = #tpu.pipeline_mode<synchronous>, transform_indices = @transform_1, window_bounds = array<i64: 192, 16>}, {pipeline_mode = #tpu.pipeline_mode<synchronous>, transform_indices = @transform_2, window_bounds = array<i64: 1, 16>}, {pipeline_mode = #tpu.pipeline_mode<synchronous>, transform_indices = @transform_3, window_bounds = array<i64: 1, 16>}, {transform_indices = @transform_4, window_bounds = array<i64: 128, 16>}]} {
    %c0 = arith.constant 0 : index
    %c0_0 = arith.constant 0 : index
    %0 = vector.load %arg1[%c0, %c0_0] : memref<128x192xbf16, #tpu.memory_space<vmem>>, vector<128x192xbf16>
    %c0_1 = arith.constant 0 : index
    %c0_2 = arith.constant 0 : index
    %1 = vector.load %arg2[%c0_1, %c0_2] : memref<192x16xbf16, #tpu.memory_space<vmem>>, vector<192x16xbf16>
    %cst = arith.constant dense<0.000000e+00> : vector<128x16xf32>
    %2 = tpu.matmul %0, %1, %cst {dimension_numbers = #tpu.dot_dimension_numbers<[1], [0], [0], [1], [0, 0, 1, 1], [], []>} : vector<128x192xbf16>, vector<192x16xbf16>, vector<128x16xf32> -> vector<128x16xf32>
    %c0_3 = arith.constant 0 : index
    %c0_4 = arith.constant 0 : index
    %3 = vector.load %arg3[%c0_3, %c0_4] : memref<1x16xf32, #tpu.memory_space<vmem>>, vector<1x16xf32>
    %4 = vector.broadcast %3 : vector<1x16xf32> to vector<128x16xf32>
    %5 = arith.mulf %2, %4 : vector<128x16xf32>
    %c0_5 = arith.constant 0 : index
    %c0_6 = arith.constant 0 : index
    %6 = vector.load %arg4[%c0_5, %c0_6] : memref<1x16xf32, #tpu.memory_space<vmem>>, vector<1x16xf32>
    %7 = vector.broadcast %6 : vector<1x16xf32> to vector<128x16xf32>
    %8 = arith.addf %5, %7 : vector<128x16xf32>
    %cst_7 = arith.constant 0.000000e+00 : f32
    %9 = vector.broadcast %cst_7 : f32 to vector<128x16xf32>
    %10 = arith.cmpf ogt, %8, %9 : vector<128x16xf32>
    %cst_8 = arith.constant 0.000000e+00 : f32
    %11 = vector.broadcast %cst_8 : f32 to vector<128x16xf32>
    %12 = arith.minimumf %8, %11 : vector<128x16xf32>
    %13 = math.exp %12 : vector<128x16xf32>
    %cst_9 = arith.constant 1.000000e+00 : f32
    %14 = vector.broadcast %cst_9 : f32 to vector<128x16xf32>
    %15 = arith.subf %13, %14 : vector<128x16xf32>
    %16 = arith.select %10, %8, %15 : vector<128x16xi1>, vector<128x16xf32>
    %17 = arith.truncf %16 : vector<128x16xf32> to vector<128x16xbf16>
    %c0_10 = arith.constant 0 : index
    %c0_11 = arith.constant 0 : index
    %18 = vector.load %arg5[%c0_10, %c0_11] : memref<128x16xbf16, #tpu.memory_space<vmem>>, vector<128x16xbf16>
    tpu.vector_store %arg5[%c0_10, %c0_11], %17 {strides = array<i32>} : memref<128x16xbf16, #tpu.memory_space<vmem>>, vector<128x16xbf16>,
    return
  }
  func.func @transform_0(%arg0: i32) -> (i32, i32) {
    %c0_i32 = arith.constant 0 : i32
    %c0_i32_0 = arith.constant 0 : i32
    return %arg0, %c0_i32 : i32, i32
  }
  func.func @transform_1(%arg0: i32) -> (i32, i32) {
    %c0_i32 = arith.constant 0 : i32
    %c0_i32_0 = arith.constant 0 : i32
    %c0_i32_1 = arith.constant 0 : i32
    return %c0_i32, %c0_i32_0 : i32, i32
  }
  func.func @transform_2(%arg0: i32) -> (i32, i32) {
    %c0_i32 = arith.constant 0 : i32
    %c0_i32_0 = arith.constant 0 : i32
    %c0_i32_1 = arith.constant 0 : i32
    return %c0_i32, %c0_i32_0 : i32, i32
  }
  func.func @transform_3(%arg0: i32) -> (i32, i32) {
    %c0_i32 = arith.constant 0 : i32
    %c0_i32_0 = arith.constant 0 : i32
    %c0_i32_1 = arith.constant 0 : i32
    return %c0_i32, %c0_i32_0 : i32, i32
  }
  func.func @transform_4(%arg0: i32) -> (i32, i32) {
    %c0_i32 = arith.constant 0 : i32
    %c0_i32_0 = arith.constant 0 : i32
    return %arg0, %c0_i32 : i32, i32
  }
}

</mosaic_0001>

<llo_original>
// kernel: _conv_device.1
$region0: #{_conv_device.1}
  #allocation0 [shape = 'u32[]', space=smem, size = 0x4, offset = 0x4, fixed_abs, tag = 'smem constant byte address 0x4 - core index']
  #allocation1 [shape = 'u32[144,128]{1,0:T(1,128)}', space=vmem, size = 0x12000, scoped, tag = 'internal scratch']
  %s0 = inlined_call_operand.vmem [shape: bf16[128,192], index: 0, kind: input, shape index: {}]
  %s1 = inlined_call_operand.vmem [shape: bf16[192,16], index: 1, kind: input, shape index: {}]
  %s2 = inlined_call_operand.vmem [shape: f32[1,16], index: 2, kind: input, shape index: {}]
  %s3 = inlined_call_operand.vmem [shape: f32[1,16], index: 3, kind: input, shape index: {}]
  %s4 = inlined_call_operand.vmem [shape: bf16[128,16], index: 4, kind: output, shape index: {}]
  %s5 = sld [smem:[#allocation0]]
  $region26: #{_conv_device.1} parent=0
    _
  %s7 = ssub.s32 1, %s5
  %s8 = scalar_select 0, %s7, %s5
  // Predicated region
  $region2: #{_conv_device.1} parent=0 // pred_check
    _
  $region3: #{_conv_device.1} parent=0 // pred_check_branch
    %10 = sbr.rel (0) target = $region5
  $region4: #{_conv_device.1} parent=0 // pred_region
    _
  $region5: #{_conv_device.1} parent=0 // pred_fallthru
    _
  // Predicated region
  $region6: #{_conv_device.1} parent=0 // pred_check
    _
  $region7: #{_conv_device.1} parent=0 // pred_check_branch
    %12 = sbr.rel (0) target = $region9
  $region8: #{_conv_device.1} parent=0 // pred_region
    _
  $region9: #{_conv_device.1} parent=0 // pred_fallthru
    _
  // Predicated region
  $region10: #{_conv_device.1} parent=0 // pred_check
    _
  $region11: #{_conv_device.1} parent=0 // pred_check_branch
    %14 = sbr.rel (0) target = $region13
  $region12: #{_conv_device.1} parent=0 // pred_region
    _
  $region13: #{_conv_device.1} parent=0 // pred_fallthru
    _
  // Predicated region
  $region14: #{_conv_device.1} parent=0 // pred_check
    _
  $region15: #{_conv_device.1} parent=0 // pred_check_branch
    %16 = sbr.rel (0) target = $region17
  $region16: #{_conv_device.1} parent=0 // pred_region
    _
  $region17: #{_conv_device.1} parent=0 // pred_fallthru
    _
  %v18 = vld [vmem:[%s0] sm:$0xff]
  %v19 = vld [vmem:[%s0 + $0x8] sm:$0xff]
  %v20 = vld [vmem:[%s0 + $0x10] sm:$0xff]
  %v21 = vld [vmem:[%s0 + $0x18] sm:$0xff]
  %v22 = vld [vmem:[%s0 + $0x20] sm:$0xff]
  %v23 = vld [vmem:[%s0 + $0x28] sm:$0xff]
  %v24 = vld [vmem:[%s0 + $0x30] sm:$0xff]
  %v25 = vld [vmem:[%s0 + $0x38] sm:$0xff]
  %v26 = vld [vmem:[%s0 + $0x40] sm:$0xff]
  %v27 = vld [vmem:[%s0 + $0x48] sm:$0xff]
  %v28 = vld [vmem:[%s0 + $0x50] sm:$0xff]
  %v29 = vld [vmem:[%s0 + $0x58] sm:$0xff]
  %v30 = vld [vmem:[%s0 + $0x60] sm:$0xff]
  %v31 = vld [vmem:[%s0 + $0x68] sm:$0xff]
  %v32 = vld [vmem:[%s0 + $0x70] sm:$0xff]
  %v33 = vld [vmem:[%s0 + $0x78] sm:$0xff]
  %v34 = vld [vmem:[%s1] sm:$0xf]
  %v35 = vld [vmem:[%s1 + $0x4] sm:$0xf]
  %v36 = vld [vmem:[%s1 + $0x8] sm:$0xf]
  %v37 = vld [vmem:[%s1 + $0xc] sm:$0xf]
  %v38 = vld [vmem:[%s1 + $0x10] sm:$0xf]
  %v39 = vld [vmem:[%s1 + $0x14] sm:$0xf]
  %v40 = vld [vmem:[%s1 + $0x18] sm:$0xf]
  %v41 = vld [vmem:[%s1 + $0x1c] sm:$0xf]
  %v42 = vld [vmem:[%s1 + $0x20] sm:$0xf]
  %v43 = vld [vmem:[%s1 + $0x24] sm:$0xf]
  %v44 = vld [vmem:[%s1 + $0x28] sm:$0xf]
  %v45 = vld [vmem:[%s1 + $0x2c] sm:$0xf]
  %v46 = vld [vmem:[%s1 + $0x30] sm:$0xf]
  %v47 = vld [vmem:[%s1 + $0x34] sm:$0xf]
  %v48 = vld [vmem:[%s1 + $0x38] sm:$0xf]
  %v49 = vld [vmem:[%s1 + $0x3c] sm:$0xf]
  %v50 = vld [vmem:[%s1 + $0x40] sm:$0xf]
  %v51 = vld [vmem:[%s1 + $0x44] sm:$0xf]
  %v52 = vld [vmem:[%s1 + $0x48] sm:$0xf]
  %v53 = vld [vmem:[%s1 + $0x4c] sm:$0xf]
  %v54 = vld [vmem:[%s1 + $0x50] sm:$0xf]
  %v55 = vld [vmem:[%s1 + $0x54] sm:$0xf]
  %v56 = vld [vmem:[%s1 + $0x58] sm:$0xf]
  %v57 = vld [vmem:[%s1 + $0x5c] sm:$0xf]
  %v74 = vunpack.c.l.b16 %v18
  %v75 = vunpack.c.h.b16 %v18
  %v76 = vunpack.c.l.b16 %v19
  %v77 = vunpack.c.h.b16 %v19
  %v78 = vunpack.c.l.b16 %v20
  %v79 = vunpack.c.h.b16 %v20
  %v80 = vunpack.c.l.b16 %v21
  %v81 = vunpack.c.h.b16 %v21
  %v82 = vunpack.c.l.b16 %v22
  %v83 = vunpack.c.h.b16 %v22
  %v84 = vunpack.c.l.b16 %v23
  %v85 = vunpack.c.h.b16 %v23
  %v86 = vunpack.c.l.b16 %v24
  %v87 = vunpack.c.h.b16 %v24
  %v88 = vunpack.c.l.b16 %v25
  %v89 = vunpack.c.h.b16 %v25
  %v90 = vunpack.c.l.b16 %v26
  %v91 = vunpack.c.h.b16 %v26
  %v92 = vunpack.c.l.b16 %v27
  %v93 = vunpack.c.h.b16 %v27
  %v94 = vunpack.c.l.b16 %v28
  %v95 = vunpack.c.h.b16 %v28
  %v96 = vunpack.c.l.b16 %v29
  %v97 = vunpack.c.h.b16 %v29
  %v98 = vunpack.c.l.b16 %v30
  %v99 = vunpack.c.h.b16 %v30
  %v100 = vunpack.c.l.b16 %v31
  %v101 = vunpack.c.h.b16 %v31
  %v102 = vunpack.c.l.b16 %v32
  %v103 = vunpack.c.h.b16 %v32
  %v104 = vunpack.c.l.b16 %v33
  %v105 = vunpack.c.h.b16 %v33
  %v106 = vpack.c.b16 %v76, %v74
  %v107 = vpack.c.b16 %v77, %v75
  %v108 = vpack.c.b16 %v80, %v78
  %v109 = vpack.c.b16 %v81, %v79
  %v110 = vpack.c.b16 %v84, %v82
  %v111 = vpack.c.b16 %v85, %v83
  %v112 = vpack.c.b16 %v88, %v86
  %v113 = vpack.c.b16 %v89, %v87
  %v114 = vpack.c.b16 %v92, %v90
  %v115 = vpack.c.b16 %v93, %v91
  %v116 = vpack.c.b16 %v96, %v94
  %v117 = vpack.c.b16 %v97, %v95
  %v118 = vpack.c.b16 %v100, %v98
  %v119 = vpack.c.b16 %v101, %v99
  %v120 = vpack.c.b16 %v104, %v102
  %v121 = vpack.c.b16 %v105, %v103
  %v154 = vunpack.c.l.b16 %v34
  %v155 = vunpack.c.l.b16 %v35
  %v156 = vunpack.c.l.b16 %v36
  %v157 = vunpack.c.l.b16 %v37
  %v158 = vunpack.c.l.b16 %v38
  %v159 = vunpack.c.l.b16 %v39
  %v160 = vunpack.c.l.b16 %v40
  %v161 = vunpack.c.l.b16 %v41
  %v162 = vunpack.c.l.b16 %v42
  %v163 = vunpack.c.l.b16 %v43
  %v164 = vunpack.c.l.b16 %v44
  %v165 = vunpack.c.l.b16 %v45
  %v166 = vunpack.c.l.b16 %v46
  %v167 = vunpack.c.l.b16 %v47
  %v168 = vunpack.c.l.b16 %v48
  %v169 = vunpack.c.l.b16 %v49
  %v170 = vunpack.c.l.b16 %v50
  %v171 = vunpack.c.l.b16 %v51
  %v172 = vunpack.c.l.b16 %v52
  %v173 = vunpack.c.l.b16 %v53
  %v174 = vunpack.c.l.b16 %v54
  %v175 = vunpack.c.l.b16 %v55
  %v176 = vunpack.c.l.b16 %v56
  %v177 = vunpack.c.l.b16 %v57
  %v178 = vpack.c.b16 %v155, %v154
  %v179 = vpack.c.b16 %v157, %v156
  %v180 = vpack.c.b16 %v159, %v158
  %v181 = vpack.c.b16 %v161, %v160
  %v182 = vpack.c.b16 %v163, %v162
  %v183 = vpack.c.b16 %v165, %v164
  %v184 = vpack.c.b16 %v167, %v166
  %v185 = vpack.c.b16 %v169, %v168
  %v186 = vpack.c.b16 %v171, %v170
  %v187 = vpack.c.b16 %v173, %v172
  %v188 = vpack.c.b16 %v175, %v174
  %v189 = vpack.c.b16 %v177, %v176
  %vm202 = vcmask 523264
  %v204 = vsel %vm202, %v107, 0
  %v207 = vsel %vm202, %v109, 0
  %v210 = vsel %vm202, %v111, 0
  %v213 = vsel %vm202, %v113, 0
  %v216 = vsel %vm202, %v115, 0
  %v219 = vsel %vm202, %v117, 0
  %v222 = vsel %vm202, %v119, 0
  %v225 = vsel %vm202, %v121, 0
  %227 = vmatprep.subr.bf16.mxu0 0
  %228 = vmatpush1.bf16.msra.mxu0 %v178
  %229 = vmatprep.subr.bf16.mxu0 0
  %230 = vmatpush1.bf16.msra.mxu0 %v179
  %231 = vmatprep.subr.bf16.mxu0 0
  %232 = vmatpush1.bf16.msra.mxu0 %v180
  %233 = vmatprep.subr.bf16.mxu0 0
  %234 = vmatpush1.bf16.msra.mxu0 %v181
  %235 = vmatprep.subr.bf16.mxu0 0
  %236 = vmatpush1.bf16.msra.mxu0 %v182
  %237 = vmatprep.subr.bf16.mxu0 0
  %238 = vmatpush1.bf16.msra.mxu0 %v183
  %239 = vmatprep.subr.bf16.mxu0 0
  %240 = vmatpush1.bf16.msra.mxu0 %v184
  %241 = vmatprep.subr.bf16.mxu0 0
  %242 = vmatpush1.bf16.msra.mxu0 %v185
  %243 = vmatprep.subr.bf16.mxu0 0
  %244 = vmatpush1.bf16.msra.mxu0 %v186
  %245 = vmatprep.subr.bf16.mxu0 0
  %246 = vmatpush1.bf16.msra.mxu0 %v187
  %247 = vmatprep.subr.bf16.mxu0 0
  %248 = vmatpush1.bf16.msra.mxu0 %v188
  %249 = vmatprep.subr.bf16.mxu0 0
  %250 = vmatpush1.bf16.msra.mxu0 %v189
  %251 = vmatprep.subr.bf16.mxu0 0
  %252 = vmatpush1.bf16.msra.mxu0 0
  %253 = vmatprep.subr.bf16.mxu0 0
  %254 = vmatpush1.bf16.msra.mxu0 0
  %255 = vmatprep.subr.bf16.mxu0 0
  %256 = vmatpush1.bf16.msra.mxu0 0
  %257 = vmatprep.subr.bf16.mxu0 0
  %258 = vmatpush1.bf16.msra.mxu0 0
  %259 = vmatprep.mubr.bf16.mxu0 %v204
  %260 = vmatmul.mubr.bf16.gmra.mrb[0].mxu0 %v106
  %v261 = vpop.f32.mrb[0].mxu0
  %v262 = vadd.f32 0.0, %v261
  %v263 = vpop.f32.mrb[0].mxu0
  %v264 = vpop.f32.mrb[0].mxu0
  %v265 = vadd.f32 0.0, %v264
  %v266 = vpop.f32.mrb[0].mxu0
  %267 = vmatprep.mubr.bf16.mxu0 %v207
  %268 = vmatmul.mubr.bf16.gmra.mrb[0].mxu0 %v108
  %v269 = vpop.f32.mrb[0].mxu0
  %v270 = vadd.f32 0.0, %v269
  %v271 = vpop.f32.mrb[0].mxu0
  %v272 = vpop.f32.mrb[0].mxu0
  %v273 = vadd.f32 0.0, %v272
  %v274 = vpop.f32.mrb[0].mxu0
  %275 = vmatprep.mubr.bf16.mxu0 %v210
  %276 = vmatmul.mubr.bf16.gmra.mrb[0].mxu0 %v110
  %v277 = vpop.f32.mrb[0].mxu0
  %v278 = vadd.f32 0.0, %v277
  %v279 = vpop.f32.mrb[0].mxu0
  %v280 = vpop.f32.mrb[0].mxu0
  %v281 = vadd.f32 0.0, %v280
  %v282 = vpop.f32.mrb[0].mxu0
  %283 = vmatprep.mubr.bf16.mxu0 %v213
  %284 = vmatmul.mubr.bf16.gmra.mrb[0].mxu0 %v112
  %v285 = vpop.f32.mrb[0].mxu0
  %v286 = vadd.f32 0.0, %v285
  %v287 = vpop.f32.mrb[0].mxu0
  %v288 = vpop.f32.mrb[0].mxu0
  %v289 = vadd.f32 0.0, %v288
  %v290 = vpop.f32.mrb[0].mxu0
  %291 = vmatprep.mubr.bf16.mxu0 %v216
  %292 = vmatmul.mubr.bf16.gmra.mrb[0].mxu0 %v114
  %v293 = vpop.f32.mrb[0].mxu0
  %v294 = vadd.f32 0.0, %v293
  %v295 = vpop.f32.mrb[0].mxu0
  %v296 = vpop.f32.mrb[0].mxu0
  %v297 = vadd.f32 0.0, %v296
  %v298 = vpop.f32.mrb[0].mxu0
  %299 = vmatprep.mubr.bf16.mxu0 %v219
  %300 = vmatmul.mubr.bf16.gmra.mrb[0].mxu0 %v116
  %v301 = vpop.f32.mrb[0].mxu0
  %v302 = vadd.f32 0.0, %v301
  %v303 = vpop.f32.mrb[0].mxu0
  %v304 = vpop.f32.mrb[0].mxu0
  %v305 = vadd.f32 0.0, %v304
  %v306 = vpop.f32.mrb[0].mxu0
  %307 = vmatprep.mubr.bf16.mxu0 %v222
  %308 = vmatmul.mubr.bf16.gmra.mrb[0].mxu0 %v118
  %v309 = vpop.f32.mrb[0].mxu0
  %v310 = vadd.f32 0.0, %v309
  %v311 = vpop.f32.mrb[0].mxu0
  %v312 = vpop.f32.mrb[0].mxu0
  %v313 = vadd.f32 0.0, %v312
  %v314 = vpop.f32.mrb[0].mxu0
  %315 = vmatprep.mubr.bf16.mxu0 %v225
  %316 = vmatmul.mubr.bf16.gmra.mrb[0].mxu0 %v120
  %v317 = vpop.f32.mrb[0].mxu0
  %v318 = vadd.f32 0.0, %v317
  %v319 = vpop.f32.mrb[0].mxu0
  %v320 = vpop.f32.mrb[0].mxu0
  %v321 = vadd.f32 0.0, %v320
  %v322 = vpop.f32.mrb[0].mxu0
  %323 = vdwg.mxu0
  %v324 = vld [vmem:[%s2] sm:$0x1]
  %v326 = vlaneseq
  %v327 = vshrl.u32 %v326, 7
  %v328 = vsub.s32 0, %v327
  %v329 = vrot.slane %v324, %v328
  %v331 = vmul.f32 %v262, %v329
  %v332 = vmul.f32 %v265, %v329
  %v333 = vmul.f32 %v270, %v329
  %v334 = vmul.f32 %v273, %v329
  %v335 = vmul.f32 %v278, %v329
  %v336 = vmul.f32 %v281, %v329
  %v337 = vmul.f32 %v286, %v329
  %v338 = vmul.f32 %v289, %v329
  %v339 = vmul.f32 %v294, %v329
  %v340 = vmul.f32 %v297, %v329
  %v341 = vmul.f32 %v302, %v329
  %v342 = vmul.f32 %v305, %v329
  %v343 = vmul.f32 %v310, %v329
  %v344 = vmul.f32 %v313, %v329
  %v345 = vmul.f32 %v318, %v329
  %v346 = vmul.f32 %v321, %v329
  %v347 = vld [vmem:[%s3] sm:$0x1]
  %v349 = vlaneseq
  %v350 = vshrl.u32 %v349, 7
  %v351 = vsub.s32 0, %v350
  %v352 = vrot.slane %v347, %v351
  %v354 = vadd.f32 %v331, %v352
  %v355 = vadd.f32 %v332, %v352
  %v356 = vadd.f32 %v333, %v352
  %v357 = vadd.f32 %v334, %v352
  %v358 = vadd.f32 %v335, %v352
  %v359 = vadd.f32 %v336, %v352
  %v360 = vadd.f32 %v337, %v352
  %v361 = vadd.f32 %v338, %v352
  %v362 = vadd.f32 %v339, %v352
  %v363 = vadd.f32 %v340, %v352
  %v364 = vadd.f32 %v341, %v352
  %v365 = vadd.f32 %v342, %v352
  %v366 = vadd.f32 %v343, %v352
  %v367 = vadd.f32 %v344, %v352
  %v368 = vadd.f32 %v345, %v352
  %v369 = vadd.f32 %v346, %v352
  %vm370 = vcmp.gt.f32.partialorder %v354, 0.0
  %vm371 = vcmp.gt.f32.partialorder %v355, 0.0
  %vm372 = vcmp.gt.f32.partialorder %v356, 0.0
  %vm373 = vcmp.gt.f32.partialorder %v357, 0.0
  %vm374 = vcmp.gt.f32.partialorder %v358, 0.0
  %vm375 = vcmp.gt.f32.partialorder %v359, 0.0
  %vm376 = vcmp.gt.f32.partialorder %v360, 0.0
  %vm377 = vcmp.gt.f32.partialorder %v361, 0.0
  %vm378 = vcmp.gt.f32.partialorder %v362, 0.0
  %vm379 = vcmp.gt.f32.partialorder %v363, 0.0
  %vm380 = vcmp.gt.f32.partialorder %v364, 0.0
  %vm381 = vcmp.gt.f32.partialorder %v365, 0.0
  %vm382 = vcmp.gt.f32.partialorder %v366, 0.0
  %vm383 = vcmp.gt.f32.partialorder %v367, 0.0
  %vm384 = vcmp.gt.f32.partialorder %v368, 0.0
  %vm385 = vcmp.gt.f32.partialorder %v369, 0.0
  %v386 = vmin.f32 %v354, 0.0
  %v387 = vmin.f32 %v355, 0.0
  %v388 = vmin.f32 %v356, 0.0
  %v389 = vmin.f32 %v357, 0.0
  %v390 = vmin.f32 %v358, 0.0
  %v391 = vmin.f32 %v359, 0.0
  %v392 = vmin.f32 %v360, 0.0
  %v393 = vmin.f32 %v361, 0.0
  %v394 = vmin.f32 %v362, 0.0
  %v395 = vmin.f32 %v363, 0.0
  %v396 = vmin.f32 %v364, 0.0
  %v397 = vmin.f32 %v365, 0.0
  %v398 = vmin.f32 %v366, 0.0
  %v399 = vmin.f32 %v367, 0.0
  %v400 = vmin.f32 %v368, 0.0
  %v401 = vmin.f32 %v369, 0.0
  %v402 = vmul.f32 %v386, 1.442695
  %v403 = vpow.pop %v402
  %v404 = vmul.f32 %v387, 1.442695
  %v405 = vpow.pop %v404
  %v406 = vmul.f32 %v388, 1.442695
  %v407 = vpow.pop %v406
  %v408 = vmul.f32 %v389, 1.442695
  %v409 = vpow.pop %v408
  %v410 = vmul.f32 %v390, 1.442695
  %v411 = vpow.pop %v410
  %v412 = vmul.f32 %v391, 1.442695
  %v413 = vpow.pop %v412
  %v414 = vmul.f32 %v392, 1.442695
  %v415 = vpow.pop %v414
  %v416 = vmul.f32 %v393, 1.442695
  %v417 = vpow.pop %v416
  %v418 = vmul.f32 %v394, 1.442695
  %v419 = vpow.pop %v418
  %v420 = vmul.f32 %v395, 1.442695
  %v421 = vpow.pop %v420
  %v422 = vmul.f32 %v396, 1.442695
  %v423 = vpow.pop %v422
  %v424 = vmul.f32 %v397, 1.442695
  %v425 = vpow.pop %v424
  %v426 = vmul.f32 %v398, 1.442695
  %v427 = vpow.pop %v426
  %v428 = vmul.f32 %v399, 1.442695
  %v429 = vpow.pop %v428
  %v430 = vmul.f32 %v400, 1.442695
  %v431 = vpow.pop %v430
  %v432 = vmul.f32 %v401, 1.442695
  %v433 = vpow.pop %v432
  %v434 = vsub.f32 %v403, 1.0
  %v435 = vsub.f32 %v405, 1.0
  %v436 = vsub.f32 %v407, 1.0
  %v437 = vsub.f32 %v409, 1.0
  %v438 = vsub.f32 %v411, 1.0
  %v439 = vsub.f32 %v413, 1.0
  %v440 = vsub.f32 %v415, 1.0
  %v441 = vsub.f32 %v417, 1.0
  %v442 = vsub.f32 %v419, 1.0
  %v443 = vsub.f32 %v421, 1.0
  %v444 = vsub.f32 %v423, 1.0
  %v445 = vsub.f32 %v425, 1.0
  %v446 = vsub.f32 %v427, 1.0
  %v447 = vsub.f32 %v429, 1.0
  %v448 = vsub.f32 %v431, 1.0
  %v449 = vsub.f32 %v433, 1.0
  %v450 = vsel %vm370, %v354, %v434
  %v451 = vsel %vm371, %v355, %v435
  %v452 = vsel %vm372, %v356, %v436
  %v453 = vsel %vm373, %v357, %v437
  %v454 = vsel %vm374, %v358, %v438
  %v455 = vsel %vm375, %v359, %v439
  %v456 = vsel %vm376, %v360, %v440
  %v457 = vsel %vm377, %v361, %v441
  %v458 = vsel %vm378, %v362, %v442
  %v459 = vsel %vm379, %v363, %v443
  %v460 = vsel %vm380, %v364, %v444
  %v461 = vsel %vm381, %v365, %v445
  %v462 = vsel %vm382, %v366, %v446
  %v463 = vsel %vm383, %v367, %v447
  %v464 = vsel %vm384, %v368, %v448
  %v465 = vsel %vm385, %v369, %v449
  %v466 = vpack.c.bf16 %v451, %v450
  %v467 = vpack.c.bf16 %v453, %v452
  %v468 = vpack.c.bf16 %v455, %v454
  %v469 = vpack.c.bf16 %v457, %v456
  %v470 = vpack.c.bf16 %v459, %v458
  %v471 = vpack.c.bf16 %v461, %v460
  %v472 = vpack.c.bf16 %v463, %v462
  %v473 = vpack.c.bf16 %v465, %v464
  %v482 = vunpack.c.l.b16 %v466
  %v483 = vunpack.c.h.b16 %v466
  %v484 = vunpack.c.l.b16 %v467
  %v485 = vunpack.c.h.b16 %v467
  %v486 = vunpack.c.l.b16 %v468
  %v487 = vunpack.c.h.b16 %v468
  %v488 = vunpack.c.l.b16 %v469
  %v489 = vunpack.c.h.b16 %v469
  %v490 = vunpack.c.l.b16 %v470
  %v491 = vunpack.c.h.b16 %v470
  %v492 = vunpack.c.l.b16 %v471
  %v493 = vunpack.c.h.b16 %v471
  %v494 = vunpack.c.l.b16 %v472
  %v495 = vunpack.c.h.b16 %v472
  %v496 = vunpack.c.l.b16 %v473
  %v497 = vunpack.c.h.b16 %v473
  %v498 = vpack.c.b16 %v482, %v482
  %v499 = vpack.c.b16 %v483, %v483
  %v500 = vpack.c.b16 %v484, %v484
  %v501 = vpack.c.b16 %v485, %v485
  %v502 = vpack.c.b16 %v486, %v486
  %v503 = vpack.c.b16 %v487, %v487
  %v504 = vpack.c.b16 %v488, %v488
  %v505 = vpack.c.b16 %v489, %v489
  %v506 = vpack.c.b16 %v490, %v490
  %v507 = vpack.c.b16 %v491, %v491
  %v508 = vpack.c.b16 %v492, %v492
  %v509 = vpack.c.b16 %v493, %v493
  %v510 = vpack.c.b16 %v494, %v494
  %v511 = vpack.c.b16 %v495, %v495
  %v512 = vpack.c.b16 %v496, %v496
  %v513 = vpack.c.b16 %v497, %v497
  %vm530 = vcmask 125952
  %531 = vst.msk [vmem:[%s4] sm:$0xf] %vm530, %v498
  %532 = vst.msk [vmem:[%s4 + $0x4] sm:$0xf] %vm530, %v499
  %533 = vst.msk [vmem:[%s4 + $0x8] sm:$0xf] %vm530, %v500
  %534 = vst.msk [vmem:[%s4 + $0xc] sm:$0xf] %vm530, %v501
  %535 = vst.msk [vmem:[%s4 + $0x10] sm:$0xf] %vm530, %v502
  %536 = vst.msk [vmem:[%s4 + $0x14] sm:$0xf] %vm530, %v503
  %537 = vst.msk [vmem:[%s4 + $0x18] sm:$0xf] %vm530, %v504
  %538 = vst.msk [vmem:[%s4 + $0x1c] sm:$0xf] %vm530, %v505
  %539 = vst.msk [vmem:[%s4 + $0x20] sm:$0xf] %vm530, %v506
  %540 = vst.msk [vmem:[%s4 + $0x24] sm:$0xf] %vm530, %v507
  %541 = vst.msk [vmem:[%s4 + $0x28] sm:$0xf] %vm530, %v508
  %542 = vst.msk [vmem:[%s4 + $0x2c] sm:$0xf] %vm530, %v509
  %543 = vst.msk [vmem:[%s4 + $0x30] sm:$0xf] %vm530, %v510
  %544 = vst.msk [vmem:[%s4 + $0x34] sm:$0xf] %vm530, %v511
  %545 = vst.msk [vmem:[%s4 + $0x38] sm:$0xf] %vm530, %v512
  %546 = vst.msk [vmem:[%s4 + $0x3c] sm:$0xf] %vm530, %v513
  // Predicated region
  $region18: #{_conv_device.1} parent=0 // pred_check
    _
  $region19: #{_conv_device.1} parent=0 // pred_check_branch
    %548 = sbr.rel (0) target = $region21
  $region20: #{_conv_device.1} parent=0 // pred_region
    _
  $region21: #{_conv_device.1} parent=0 // pred_fallthru
    _
  // Predicated region
  $region22: #{_conv_device.1} parent=0 // pred_check
    _
  $region23: #{_conv_device.1} parent=0 // pred_check_branch
    %550 = sbr.rel (0) target = $region25
  $region24: #{_conv_device.1} parent=0 // pred_region
    _
  $region25: #{_conv_device.1} parent=0 // pred_fallthru
    _

</llo_original>
